<compile_context>
chip_gen: v7x
topology: tpu7x:2x2x1
jax: 0.10.0
libtpu: 0.0.40
codegen_flags: <defaults>
</compile_context>

<pallas_src>
import jax
import jax.numpy as jnp
from jax.experimental import pallas as pl
from jax.experimental.pallas import tpu as pltpu


def _copy_cost(prototype):
    num_embed, feature_dim = prototype.shape
    itemsize = jnp.dtype(prototype.dtype).itemsize
    return pl.CostEstimate(
        flops=0,
        transcendentals=0,
        bytes_accessed=2 * num_embed * feature_dim * itemsize,
    )


# ---------------------------------------------------------------------------
# Preferred path: pure pass-through (exact PyTorch semantics, zero cost).
# ---------------------------------------------------------------------------
def prototype_forward(prototype, labels, batch_classes):
    """Prototype.forward(batch_classes) -> (prototype, labels).

    `batch_classes` is accepted (to match the PyTorch signature) but unused,
    exactly as in the reference module.  No data is moved.
    """
    del batch_classes  # unused, matching PyTorch semantics
    return prototype, labels


# ---------------------------------------------------------------------------
# Materialized copy: single HBM->HBM DMA (no grid, no VMEM round-trip).
# ---------------------------------------------------------------------------
def _hbm_dma_copy_kernel(src_hbm_ref, dst_hbm_ref, sem):
    cp = pltpu.make_async_copy(src_hbm_ref, dst_hbm_ref, sem)
    cp.start()
    cp.wait()


def prototype_forward_materialized(prototype, labels, batch_classes):
    """Same semantics, but returns a freshly materialized prototype copy."""
    del batch_classes  # unused, matching PyTorch semantics
    proto_out = pl.pallas_call(
        _hbm_dma_copy_kernel,
        out_shape=jax.ShapeDtypeStruct(prototype.shape, prototype.dtype),
        in_specs=[pl.BlockSpec(memory_space=pl.ANY)],
        out_specs=pl.BlockSpec(memory_space=pl.ANY),
        scratch_shapes=[pltpu.SemaphoreType.DMA(())],
        cost_estimate=_copy_cost(prototype),
    )(prototype)
    return proto_out, labels


# ---------------------------------------------------------------------------
# BlockSpec-tiled copy (reference / comparison path).
# ---------------------------------------------------------------------------
def _tiled_copy_kernel(proto_ref, out_ref):
    out_ref[...] = proto_ref[...]


def _row_tile(num_embed, feature_dim, itemsize,
              vmem_budget_bytes=12 << 20, target_block_bytes=4 << 20):
    """Row tile: multiple of 8, divides num_embed, ~2-8 MiB lane-dense block.

    Budget is kept under v5e's 16 MiB default scoped-VMEM limit (double-
    buffered input + output => 4x block bytes resident).
    """
    if num_embed < 8 or num_embed % 8 != 0:
        # Full-array escape hatch for the (8, 128) sublane rule.
        return num_embed
    bytes_per_row = max(1, feature_dim * itemsize)
    cap_rows = max(8, ((vmem_budget_bytes // (4 * bytes_per_row)) // 8) * 8)
    want_rows = max(8, ((target_block_bytes // bytes_per_row) // 8) * 8)
    tm = min(num_embed, cap_rows, want_rows)
    # v7x megacore: give the "parallel" row axis >= 2 steps when the array is
    # big enough that splitting is worth the extra ~0.35 us grid step.
    if tm == num_embed and num_embed >= 16 and num_embed * bytes_per_row >= (2 << 20):
        tm = max(8, ((num_embed // 2) // 8) * 8)
    # Prefer a tile that divides num_embed -> no masked tail stores.
    while tm > 8 and num_embed % tm != 0:
        tm -= 8
    return tm


def prototype_forward_tiled(prototype, labels, batch_classes):
    """Same semantics; fresh copy via row-tiled, software-pipelined VMEM path."""
    del batch_classes  # unused, matching PyTorch semantics
    num_embed, feature_dim = prototype.shape
    itemsize = jnp.dtype(prototype.dtype).itemsize
    tm = _row_tile(num_embed, feature_dim, itemsize)
    grid = (pl.cdiv(num_embed, tm),)

    proto_out = pl.pallas_call(
        _tiled_copy_kernel,
        out_shape=jax.ShapeDtypeStruct((num_embed, feature_dim), prototype.dtype),
        grid=grid,
        in_specs=[pl.BlockSpec((tm, feature_dim), lambda i: (i, 0))],
        out_specs=pl.BlockSpec((tm, feature_dim), lambda i: (i, 0)),
        compiler_params=pltpu.CompilerParams(
            dimension_semantics=("parallel",)),
        cost_estimate=_copy_cost(prototype),
    )(prototype)
    return proto_out, labels


# ---------------------------------------------------------------------------
# Parameter construction (mirrors Prototype.__init__).
# ---------------------------------------------------------------------------
def make_prototype_params(num_embed, n_classes, prototype_per_class,
                          feature_dim, key):
    """Deterministic re-implementation of Prototype.__init__ parameter setup."""
    # nn.Parameter(torch.ones(num_embed, feature_dim)).uniform_(-1/N, 1/N)
    prototype = jax.random.uniform(
        key, (num_embed, feature_dim), dtype=jnp.float32,
        minval=-1.0 / num_embed, maxval=1.0 / num_embed)
    # labels = arange(n_classes).unsqueeze(-1).repeat(1, P).reshape(-1)
    labels = jnp.repeat(jnp.arange(n_classes, dtype=jnp.int32),
                        prototype_per_class)
    return prototype, labels


if __name__ == "__main__":
    # Small shapes consistent with the module (feature_dim kept lane-dense).
    n_classes = 4
    prototype_per_class = 2
    num_embed = n_classes * prototype_per_class   # 8
    feature_dim = 128                             # lane-dense stand-in for 2048
    n_domains = 3                                 # unused in forward

    key = jax.random.PRNGKey(0)
    k_proto, k_batch = jax.random.split(key)

    prototype, labels = make_prototype_params(
        num_embed, n_classes, prototype_per_class, feature_dim, k_proto)

    # `batch_classes` argument (ignored by forward), e.g. a batch of class ids.
    batch_classes = jax.random.randint(
        k_batch, (2,), 0, n_classes, dtype=jnp.int32)

    # Preferred zero-cost pass-through.
    proto_out, labels_out = prototype_forward(prototype, labels, batch_classes)
    # Materialized copy via a single HBM->HBM DMA.
    proto_dma, labels_dma = prototype_forward_materialized(
        prototype, labels, batch_classes)
    # Materialized copy via the tiled BlockSpec pipeline.
    proto_tiled, labels_tiled = prototype_forward_tiled(
        prototype, labels, batch_classes)
    jax.block_until_ready(
        (proto_out, labels_out, proto_dma, labels_dma, proto_tiled, labels_tiled))

    # Verify pass-through semantics.
    assert proto_out.shape == (num_embed, feature_dim)
    assert proto_out.dtype == jnp.float32
    assert labels_out.shape == (n_classes * prototype_per_class,)
    assert bool(jnp.all(proto_out == prototype))
    assert bool(jnp.all(proto_dma == prototype))
    assert bool(jnp.all(proto_tiled == prototype))
    assert bool(jnp.all(labels_out == labels))
    assert bool(jnp.all(labels_dma == labels))
    assert bool(jnp.all(labels_tiled == labels))

    print("KERNEL_OK")
</pallas_src>

<mosaic_0001>
module attributes {stable_mosaic.version = 11 : i64} {
  func.func @_hbm_dma_copy_kernel(%arg0: memref<8x128xf32, #tpu.memory_space<any>>, %arg1: memref<8x128xf32, #tpu.memory_space<any>>, %arg2: memref<!tpu.dma_semaphore, #tpu.memory_space<semaphore_mem>>) attributes {dimension_semantics = [], scalar_prefetch = 0 : i64, scratch_operands = 1 : i64, tpu.core_type = #tpu.core_type<tc>} {
    tpu.enqueue_dma source(%arg0 : memref<8x128xf32, #tpu.memory_space<any>>) target(%arg1 : memref<8x128xf32, #tpu.memory_space<any>>) target_semaphore(%arg2 : memref<!tpu.dma_semaphore, #tpu.memory_space<semaphore_mem>>)
    tpu.wait_dma2 semaphore(%arg2 : memref<!tpu.dma_semaphore, #tpu.memory_space<semaphore_mem>>) src(%arg0 : memref<8x128xf32, #tpu.memory_space<any>>) dst(%arg1 : memref<8x128xf32, #tpu.memory_space<any>>)
    return
  }
}

</mosaic_0001>

<llo_original>
// kernel: tpu_custom_call.1
$region0: #{tpu_custom_call.1}
  #allocation0 [shape = 'u32[]', space=smem, size = 0x4, offset = 0x4, fixed_abs, tag = 'smem constant byte address 0x4 - core index']
  #allocation1 [shape = 'u32[144,128]{1,0:T(1,128)}', space=vmem, size = 0x12000, scoped, tag = 'internal scratch']
  #allocation2 [shape = 's32[1]{0}', space=sflag, size = 0x4, scoped, tag = 'scratch operand']
  #allocation3 [shape = 's32[]', space=sflag, size = 0x4, offset = 0, fixed_abs, tag = 'sflag constant byte address 0x0 - dummy sync flag']
  #allocation4 [shape = 'u32[0]{0}', space=smem, size = 0, offset = 0, fixed_abs, tag = 'smem constant byte address 0x0 - null']
  %s0 = inlined_call_operand.hbm [shape: f32[8,128], index: 0, kind: input, shape index: {}]
  %s1 = inlined_call_operand.hbm [shape: f32[8,128], index: 1, kind: output, shape index: {}]
  %s2 = sld [smem:[#allocation0]]
  $region2: #{tpu_custom_call.1} parent=0
    _
  %s4 = ssub.s32 1, %s2
  %s5 = scalar_select 0, %s4, %s2
  %s7 = sshll.u32 1, 14
  %s8 = sxor.u32 4294967295, %s7
  %s11 = sshll.u32 3, 24
  %s12 = sxor.u32 4294967295, %s11
  %s13 = sand.u32 0, %s12
  %s15 = sor.u32 %s13, 0
  %18 = dma.general %s0, 128, %s1, [#allocation2], [#allocation3], [#allocation4], %s15, 0
  %s19 = smul.u32 8, 1
  %s20 = sshll.u32 %s19, 4
  %21 = dma.done [#allocation2], %s20
  %22 = vsyncmov [#allocation2]
  %s23 = vpop.sfrf %22
  %p24 = scmp.eq.s32.totalorder %s23, 0
  %p25 = pneg %p24
  %27 = shalt.err (%p25)

</llo_original>
